<compile_context>
chip_gen: v6e
topology: v6e:2x2x1
jax: 0.10.0
libtpu: 0.0.40
codegen_flags: <defaults>
</compile_context>

<pallas_src>
import jax
import jax.numpy as jnp
from jax.experimental import pallas as pl
from jax.experimental.pallas import tpu as pltpu

_EPS = 1e-5


def _round_up(a, b):
    return (a + b - 1) // b * b


def _choose_tile_m(m, cin, cout, budget_bytes=20 << 20):
    """Pick the pixel-tile size TM (lane axis), sized for double-buffered f32 tiles."""
    rows = _round_up(cin, 8) + _round_up(4 * cout, 8)      # sublane-padded x-tile + out-tile rows
    per_lane = 2 * rows * 4                                # 2 buffers, f32
    tm = budget_bytes // per_lane
    tm = max(512, min(tm, 1 << 16))
    tm = min(tm, _round_up(m, 512))
    return (tm // 512) * 512                               # multiple of 512 (lane-aligned)


def _stats_kernel(w_ref, x_ref, s_ref, ss_ref):
    # w_ref: (4*Cout, Cin) packed ConvTranspose2d weight (rows = (co, ki, kj))
    # x_ref: (Cin, TM)     pixel tile (channels on sublanes, pixels on lanes)
    # s_ref/ss_ref: (4*Cout, 1) global accumulators (same block revisited across the grid)
    @pl.when(pl.program_id(0) == 0)
    def _():
        s_ref[...] = jnp.zeros_like(s_ref)
        ss_ref[...] = jnp.zeros_like(ss_ref)

    y = jnp.dot(w_ref[...], x_ref[...], preferred_element_type=jnp.float32)  # (4*Cout, TM)
    s_ref[...] += jnp.sum(y, axis=1, keepdims=True)
    ss_ref[...] += jnp.sum(y * y, axis=1, keepdims=True)


def _apply_kernel(w_ref, b_ref, x_ref, o_ref):
    # BN scale is pre-folded into w_ref, BN shift is b_ref; just matmul + bias + ReLU.
    y = jnp.dot(w_ref[...], x_ref[...], preferred_element_type=jnp.float32)  # (4*Cout, TM)
    o_ref[...] = jnp.maximum(y + b_ref[...], 0.0).astype(o_ref.dtype)


def upsampler_forward(x_nchw, w, gamma, beta, eps=_EPS):
    """x_nchw: (N, Cin, H, W); w: (Cin, Cout, 2, 2); gamma/beta: (Cout,). Returns (N, Cout, 2H, 2W)."""
    n, cin, h, wid = x_nchw.shape
    cout = w.shape[1]
    m = n * h * wid
    p = 4 * cout                                       # packed rows: p = co*4 + ki*2 + kj

    # --- glue: channels->sublanes, pixels->lanes (leading-dim transpose only; free for N==1) ---
    x_cm = jnp.transpose(x_nchw, (1, 0, 2, 3)).reshape(cin, m).astype(jnp.float32)
    wp = jnp.transpose(w, (1, 2, 3, 0)).reshape(p, cin).astype(jnp.float32)

    tm = _choose_tile_m(m, cin, cout)
    m_pad = _round_up(m, tm)
    if m_pad != m:
        # zero-padded pixels contribute exactly 0 to the stats and are sliced off at the end
        x_cm = jnp.pad(x_cm, ((0, 0), (0, m_pad - m)))
    grid = (m_pad // tm,)

    x_spec = pl.BlockSpec((cin, tm), lambda i: (0, i))
    w_spec = pl.BlockSpec((p, cin), lambda i: (0, 0))
    vec_spec = pl.BlockSpec((p, 1), lambda i: (0, 0))

    # --- pass 1: per packed-row sum / sum-of-squares of the conv-transpose output ---
    s_p, ss_p = pl.pallas_call(
        _stats_kernel,
        grid=grid,
        in_specs=[w_spec, x_spec],
        out_specs=(vec_spec, vec_spec),
        out_shape=(jax.ShapeDtypeStruct((p, 1), jnp.float32),
                   jax.ShapeDtypeStruct((p, 1), jnp.float32)),
        compiler_params=pltpu.CompilerParams(
            dimension_semantics=("arbitrary",),            # accumulator carried across the grid
            vmem_limit_bytes=32 * 1024 * 1024),
    )(wp, x_cm)

    # --- tiny finalize (pure JAX): BN batch stats, folded into the weight/bias ---
    cnt = jnp.float32(4 * m)                               # elements per channel = N*(2H)*(2W)
    s_c = s_p.reshape(cout, 4).sum(axis=1)
    ss_c = ss_p.reshape(cout, 4).sum(axis=1)
    mean = s_c / cnt
    var = jnp.maximum(ss_c / cnt - mean * mean, 0.0)       # biased variance (PyTorch train-mode BN)
    # TODO(synk): E[y^2]-mean^2 can lose precision for very large-magnitude activations; switch the
    # stats pass to a centered second sweep if that regime ever matters.
    inv = jax.lax.rsqrt(var + jnp.float32(eps))
    scale = gamma.astype(jnp.float32) * inv
    shift = beta.astype(jnp.float32) - mean * scale
    w_scaled = wp * jnp.repeat(scale, 4)[:, None]          # (4*Cout, Cin)
    bias = jnp.repeat(shift, 4)[:, None]                   # (4*Cout, 1)

    # --- pass 2: recompute cheap K=Cin matmul, apply folded BN + ReLU, lane-dense stores ---
    out_cm = pl.pallas_call(
        _apply_kernel,
        grid=grid,
        in_specs=[w_spec, vec_spec, x_spec],
        out_specs=pl.BlockSpec((p, tm), lambda i: (0, i)),
        out_shape=jax.ShapeDtypeStruct((p, m_pad), jnp.float32),
        compiler_params=pltpu.CompilerParams(
            dimension_semantics=("parallel",),             # shards across 2 TCs on v7x
            vmem_limit_bytes=32 * 1024 * 1024),
    )(w_scaled, bias, x_cm)

    # --- glue: unpack (co,ki,kj, n,h,w) -> NCHW (N, Cout, 2H, 2W) ---
    # TODO(synk): this final interleave stays in the wrapper (strided NCHW scatter has no clean
    # BlockSpec form); an NHWC end-to-end model would consume the packed layout directly.
    y = out_cm[:, :m].reshape(cout, 2, 2, n, h, wid)
    y = jnp.transpose(y, (3, 0, 4, 1, 5, 2)).reshape(n, cout, 2 * h, 2 * wid)
    return y


def upsampler_reference(x, w, gamma, beta, eps=_EPS):
    """Pure-JAX reference of the PyTorch forward (training-mode BN)."""
    N, Cin, H, W = x.shape
    Cout = w.shape[1]
    y = jnp.einsum("nihw,iokl->nohwkl", x, w)              # (N, Cout, H, W, 2, 2)
    y = jnp.transpose(y, (0, 1, 2, 4, 3, 5)).reshape(N, Cout, 2 * H, 2 * W)
    mean = jnp.mean(y, axis=(0, 2, 3), keepdims=True)
    var = jnp.mean((y - mean) ** 2, axis=(0, 2, 3), keepdims=True)
    yn = (y - mean) / jnp.sqrt(var + eps)
    yn = yn * gamma.reshape(1, -1, 1, 1) + beta.reshape(1, -1, 1, 1)
    return jnp.maximum(yn, 0.0)


if __name__ == "__main__":
    key = jax.random.PRNGKey(0)
    k_x, k_w, k_g, k_b = jax.random.split(key, 4)

    N, Cin, Cout, H, W = 2, 4, 8, 16, 16
    x = jax.random.normal(k_x, (N, Cin, H, W), dtype=jnp.float32)
    # ConvTranspose2d weight shape: (in_channels, out_channels, kH, kW)
    w = 0.1 * jax.random.normal(k_w, (Cin, Cout, 2, 2), dtype=jnp.float32)
    gamma = 1.0 + 0.1 * jax.random.normal(k_g, (Cout,), dtype=jnp.float32)
    beta = 0.1 * jax.random.normal(k_b, (Cout,), dtype=jnp.float32)

    out = jax.block_until_ready(upsampler_forward(x, w, gamma, beta))
    ref = upsampler_reference(x, w, gamma, beta)

    assert out.shape == (N, Cout, 2 * H, 2 * W), out.shape
    assert jnp.allclose(out, ref, atol=1e-4, rtol=1e-4), float(jnp.max(jnp.abs(out - ref)))

    print("KERNEL_OK")
</pallas_src>

<mosaic_0001>
module attributes {stable_mosaic.version = 11 : i64} {
  func.func @_stats_kernel(%arg0: i32, %arg1: memref<32x4xf32, #tpu.memory_space<vmem>>, %arg2: memref<4x512xf32, #tpu.memory_space<vmem>>, %arg3: memref<32x1xf32, #tpu.memory_space<vmem>>, %arg4: memref<32x1xf32, #tpu.memory_space<vmem>>) attributes {dimension_semantics = [#tpu.dimension_semantics<arbitrary>], iteration_bounds = array<i64: 1>, scalar_prefetch = 0 : i64, scratch_operands = 0 : i64, tpu.core_type = #tpu.core_type<tc>, window_params = [{pipeline_mode = #tpu.pipeline_mode<synchronous>, transform_indices = @transform_0, window_bounds = array<i64: 32, 4>}, {transform_indices = @transform_1, window_bounds = array<i64: 4, 512>}, {pipeline_mode = #tpu.pipeline_mode<synchronous>, transform_indices = @transform_2, window_bounds = array<i64: 32, 1>}, {pipeline_mode = #tpu.pipeline_mode<synchronous>, transform_indices = @transform_3, window_bounds = array<i64: 32, 1>}]} {
    %c0_i32 = arith.constant 0 : i32
    %0 = arith.cmpi eq, %arg0, %c0_i32 : i32
    %1 = arith.extui %0 : i1 to i32
    %c0_i32_0 = arith.constant 0 : i32
    %2 = arith.cmpi ne, %1, %c0_i32_0 : i32
    scf.if %2 {
      %cst_14 = arith.constant 0.000000e+00 : f32
      %17 = vector.broadcast %cst_14 : f32 to vector<32x1xf32>
      %c0_15 = arith.constant 0 : index
      %c0_16 = arith.constant 0 : index
      %18 = vector.load %arg3[%c0_15, %c0_16] : memref<32x1xf32, #tpu.memory_space<vmem>>, vector<32x1xf32>
      tpu.vector_store %arg3[%c0_15, %c0_16], %17 {strides = array<i32>} : memref<32x1xf32, #tpu.memory_space<vmem>>, vector<32x1xf32>,
      %cst_17 = arith.constant 0.000000e+00 : f32
      %19 = vector.broadcast %cst_17 : f32 to vector<32x1xf32>
      %c0_18 = arith.constant 0 : index
      %c0_19 = arith.constant 0 : index
      %20 = vector.load %arg4[%c0_18, %c0_19] : memref<32x1xf32, #tpu.memory_space<vmem>>, vector<32x1xf32>
      tpu.vector_store %arg4[%c0_18, %c0_19], %19 {strides = array<i32>} : memref<32x1xf32, #tpu.memory_space<vmem>>, vector<32x1xf32>,
    } else {
    }
    %c0 = arith.constant 0 : index
    %c0_1 = arith.constant 0 : index
    %3 = vector.load %arg1[%c0, %c0_1] : memref<32x4xf32, #tpu.memory_space<vmem>>, vector<32x4xf32>
    %c0_2 = arith.constant 0 : index
    %c0_3 = arith.constant 0 : index
    %4 = vector.load %arg2[%c0_2, %c0_3] : memref<4x512xf32, #tpu.memory_space<vmem>>, vector<4x512xf32>
    %cst = arith.constant dense<0.000000e+00> : vector<32x512xf32>
    %5 = tpu.matmul %3, %4, %cst {dimension_numbers = #tpu.dot_dimension_numbers<[1], [0], [0], [1], [0, 0, 1, 1], [], []>} : vector<32x4xf32>, vector<4x512xf32>, vector<32x512xf32> -> vector<32x512xf32>
    %c0_4 = arith.constant 0 : index
    %c0_5 = arith.constant 0 : index
    %6 = vector.load %arg3[%c0_4, %c0_5] : memref<32x1xf32, #tpu.memory_space<vmem>>, vector<32x1xf32>
    %cst_6 = arith.constant dense<0.000000e+00> : vector<32xf32>
    %7 = vector.multi_reduction <add>, %5, %cst_6 [1] : vector<32x512xf32> to vector<32xf32>
    %8 = vector.shape_cast %7 : vector<32xf32> to vector<32x1xf32>
    %9 = arith.addf %6, %8 : vector<32x1xf32>
    %c0_7 = arith.constant 0 : index
    %c0_8 = arith.constant 0 : index
    %10 = vector.load %arg3[%c0_7, %c0_8] : memref<32x1xf32, #tpu.memory_space<vmem>>, vector<32x1xf32>
    tpu.vector_store %arg3[%c0_7, %c0_8], %9 {strides = array<i32>} : memref<32x1xf32, #tpu.memory_space<vmem>>, vector<32x1xf32>,
    %c0_9 = arith.constant 0 : index
    %c0_10 = arith.constant 0 : index
    %11 = vector.load %arg4[%c0_9, %c0_10] : memref<32x1xf32, #tpu.memory_space<vmem>>, vector<32x1xf32>
    %12 = arith.mulf %5, %5 : vector<32x512xf32>
    %cst_11 = arith.constant dense<0.000000e+00> : vector<32xf32>
    %13 = vector.multi_reduction <add>, %12, %cst_11 [1] : vector<32x512xf32> to vector<32xf32>
    %14 = vector.shape_cast %13 : vector<32xf32> to vector<32x1xf32>
    %15 = arith.addf %11, %14 : vector<32x1xf32>
    %c0_12 = arith.constant 0 : index
    %c0_13 = arith.constant 0 : index
    %16 = vector.load %arg4[%c0_12, %c0_13] : memref<32x1xf32, #tpu.memory_space<vmem>>, vector<32x1xf32>
    tpu.vector_store %arg4[%c0_12, %c0_13], %15 {strides = array<i32>} : memref<32x1xf32, #tpu.memory_space<vmem>>, vector<32x1xf32>,
    return
  }
  func.func @transform_0(%arg0: i32) -> (i32, i32) {
    %c0_i32 = arith.constant 0 : i32
    %c0_i32_0 = arith.constant 0 : i32
    %c0_i32_1 = arith.constant 0 : i32
    return %c0_i32, %c0_i32_0 : i32, i32
  }
  func.func @transform_1(%arg0: i32) -> (i32, i32) {
    %c0_i32 = arith.constant 0 : i32
    %c0_i32_0 = arith.constant 0 : i32
    return %c0_i32, %arg0 : i32, i32
  }
  func.func @transform_2(%arg0: i32) -> (i32, i32) {
    %c0_i32 = arith.constant 0 : i32
    %c0_i32_0 = arith.constant 0 : i32
    %c0_i32_1 = arith.constant 0 : i32
    return %c0_i32, %c0_i32_0 : i32, i32
  }
  func.func @transform_3(%arg0: i32) -> (i32, i32) {
    %c0_i32 = arith.constant 0 : i32
    %c0_i32_0 = arith.constant 0 : i32
    %c0_i32_1 = arith.constant 0 : i32
    return %c0_i32, %c0_i32_0 : i32, i32
  }
}

</mosaic_0001>

<llo_original>
// kernel: tpu_custom_call.1
$region0: #{tpu_custom_call.1}
  #allocation0 [shape = 'u32[]', space=smem, size = 0x4, offset = 0x4, fixed_abs, tag = 'smem constant byte address 0x4 - core index']
  #allocation1 [shape = 'u32[144,128]{1,0:T(1,128)}', space=vmem, size = 0x12000, scoped, tag = 'internal scratch']
  %s0 = inlined_call_operand.vmem [shape: f32[32,4], index: 0, kind: input, shape index: {}]
  %s1 = inlined_call_operand.vmem [shape: f32[4,512], index: 1, kind: input, shape index: {}]
  %s2 = inlined_call_operand.vmem [shape: f32[32,1], index: 2, kind: output, shape index: {0}]
  %s3 = inlined_call_operand.vmem [shape: f32[32,1], index: 3, kind: output, shape index: {1}]
  %4 = xla_tuple %s2, %s3
  %s5 = sld [smem:[#allocation0]]
  $region30: #{tpu_custom_call.1} parent=0
    _
  %s7 = ssub.s32 1, %s5
  %s8 = scalar_select 0, %s7, %s5
  // Predicated region
  $region2: #{tpu_custom_call.1} parent=0 // pred_check
    _
  $region3: #{tpu_custom_call.1} parent=0 // pred_check_branch
    %10 = sbr.rel (0) target = $region5
  $region4: #{tpu_custom_call.1} parent=0 // pred_region
    _
  $region5: #{tpu_custom_call.1} parent=0 // pred_fallthru
    _
  // Predicated region
  $region6: #{tpu_custom_call.1} parent=0 // pred_check
    _
  $region7: #{tpu_custom_call.1} parent=0 // pred_check_branch
    %12 = sbr.rel (0) target = $region9
  $region8: #{tpu_custom_call.1} parent=0 // pred_region
    _
  $region9: #{tpu_custom_call.1} parent=0 // pred_fallthru
    _
  %p13 = scmp.eq.s32.totalorder 0, 0
  // Predicated region
  $region10: #{tpu_custom_call.1} parent=0 // pred_check
    %p14 = pneg %p13
  $region11: #{tpu_custom_call.1} parent=0 // pred_check_branch
    %16 = sbr.rel (%p14) target = $region13
  $region12: #{tpu_custom_call.1} parent=0 // pred_region
    %vm17 = vcmask 7168
    %18 = vst.msk [vmem:[%s2] sm:$0xff] %vm17, 0.0
    %19 = vst.msk [vmem:[%s2 + $0x8] sm:$0xff] %vm17, 0.0
    %20 = vst.msk [vmem:[%s2 + $0x10] sm:$0xff] %vm17, 0.0
    %21 = vst.msk [vmem:[%s2 + $0x18] sm:$0xff] %vm17, 0.0
    %22 = vst.msk [vmem:[%s3] sm:$0xff] %vm17, 0.0
    %23 = vst.msk [vmem:[%s3 + $0x8] sm:$0xff] %vm17, 0.0
    %24 = vst.msk [vmem:[%s3 + $0x10] sm:$0xff] %vm17, 0.0
    %25 = vst.msk [vmem:[%s3 + $0x18] sm:$0xff] %vm17, 0.0
  $region13: #{tpu_custom_call.1} parent=0 // pred_fallthru
    _
  %v26 = vld [vmem:[%s0] sm:$0xff]
  %v27 = vld [vmem:[%s0 + $0x8] sm:$0xff]
  %v28 = vld [vmem:[%s0 + $0x10] sm:$0xff]
  %v29 = vld [vmem:[%s0 + $0x18] sm:$0xff]
  %v30 = vld [vmem:[%s1] sm:$0xff]
  %v31 = vld [vmem:[%s1 + $0x8] sm:$0xff]
  %v34 = vcombine.high %v30, %v30
  %v35 = vcombine.high %v31, %v31
  %vm36 = vcmask 31744
  %v38 = vsel %vm36, %v26, 0
  %v41 = vsel %vm36, %v27, 0
  %v44 = vsel %vm36, %v28, 0
  %v47 = vsel %vm36, %v29, 0
  %vm49 = vcmask 1043456
  %v50 = vsel %vm49, %v30, 0
  %v52 = vsel %vm49, %v34, 0
  %v54 = vsel %vm49, %v31, 0
  %v56 = vsel %vm49, %v35, 0
  %58 = vmatprep.subr.mxu0 0.0
  %59 = vmatpush1.msra.mxu0 0.0
  %60 = vmatprep.subr.mxu0 0.0
  %61 = vmatpush1.msra.mxu0 0.0
  %62 = vmatprep.subr.mxu0 0.0
  %63 = vmatpush1.msra.mxu0 0.0
  %64 = vmatprep.subr.mxu0 0.0
  %65 = vmatpush1.msra.mxu0 0.0
  %66 = vmatprep.subr.mxu0 0.0
  %67 = vmatpush1.msra.mxu0 0.0
  %68 = vmatprep.subr.mxu0 0.0
  %69 = vmatpush1.msra.mxu0 0.0
  %70 = vmatprep.subr.mxu0 0.0
  %71 = vmatpush1.msra.mxu0 0.0
  %72 = vmatprep.subr.mxu0 0.0
  %73 = vmatpush1.msra.mxu0 0.0
  %74 = vmatprep.subr.mxu0 0.0
  %75 = vmatpush1.msra.mxu0 0.0
  %76 = vmatprep.subr.mxu0 0.0
  %77 = vmatpush1.msra.mxu0 0.0
  %78 = vmatprep.subr.mxu0 0.0
  %79 = vmatpush1.msra.mxu0 0.0
  %80 = vmatprep.subr.mxu0 0.0
  %81 = vmatpush1.msra.mxu0 0.0
  %82 = vmatprep.subr.mxu0 0.0
  %83 = vmatpush1.msra.mxu0 0.0
  %84 = vmatprep.subr.mxu0 0.0
  %85 = vmatpush1.msra.mxu0 0.0
  %86 = vmatprep.subr.mxu0 0.0
  %87 = vmatpush1.msra.mxu0 0.0
  %88 = vmatprep.subr.mxu0 %v52
  %89 = vmatpush1.msra.mxu0 %v50
  %90 = vmatprep.subr.mxu0 0.0
  %91 = vmatpush2.msra.mxu0 0.0
  %92 = vmatprep.subr.mxu0 0.0
  %93 = vmatpush2.msra.mxu0 0.0
  %94 = vmatprep.subr.mxu0 0.0
  %95 = vmatpush2.msra.mxu0 0.0
  %96 = vmatprep.subr.mxu0 0.0
  %97 = vmatpush2.msra.mxu0 0.0
  %98 = vmatprep.subr.mxu0 0.0
  %99 = vmatpush2.msra.mxu0 0.0
  %100 = vmatprep.subr.mxu0 0.0
  %101 = vmatpush2.msra.mxu0 0.0
  %102 = vmatprep.subr.mxu0 0.0
  %103 = vmatpush2.msra.mxu0 0.0
  %104 = vmatprep.subr.mxu0 0.0
  %105 = vmatpush2.msra.mxu0 0.0
  %106 = vmatprep.subr.mxu0 0.0
  %107 = vmatpush2.msra.mxu0 0.0
  %108 = vmatprep.subr.mxu0 0.0
  %109 = vmatpush2.msra.mxu0 0.0
  %110 = vmatprep.subr.mxu0 0.0
  %111 = vmatpush2.msra.mxu0 0.0
  %112 = vmatprep.subr.mxu0 0.0
  %113 = vmatpush2.msra.mxu0 0.0
  %114 = vmatprep.subr.mxu0 0.0
  %115 = vmatpush2.msra.mxu0 0.0
  %116 = vmatprep.subr.mxu0 0.0
  %117 = vmatpush2.msra.mxu0 0.0
  %118 = vmatprep.subr.mxu0 0.0
  %119 = vmatpush2.msra.mxu0 0.0
  %120 = vmatprep.subr.mxu0 0.0
  %121 = vmatpush2.msra.mxu0 0.0
  %122 = vmatprep.mubr.f32.mxu0 0.0
  %123 = vmatmul.mubr.f32.gmra.mxu0 %v38
  %v124 = vpop.f32.mrf.mxu0
  %v125 = vadd.f32 0.0, %v124
  %v126 = vpop.f32.mrf.mxu0
  %v127 = vadd.f32 0.0, %v126
  %128 = vmatprep.mubr.f32.mxu0 0.0
  %129 = vmatmul.mubr.f32.gmra.mxu0 %v41
  %v130 = vpop.f32.mrf.mxu0
  %v131 = vadd.f32 0.0, %v130
  %v132 = vpop.f32.mrf.mxu0
  %v133 = vadd.f32 0.0, %v132
  %134 = vmatprep.mubr.f32.mxu0 0.0
  %135 = vmatmul.mubr.f32.gmra.mxu0 %v44
  %v136 = vpop.f32.mrf.mxu0
  %v137 = vadd.f32 0.0, %v136
  %v138 = vpop.f32.mrf.mxu0
  %v139 = vadd.f32 0.0, %v138
  %140 = vmatprep.mubr.f32.mxu0 0.0
  %141 = vmatmul.mubr.f32.gmra.mxu0 %v47
  %v142 = vpop.f32.mrf.mxu0
  %v143 = vadd.f32 0.0, %v142
  %v144 = vpop.f32.mrf.mxu0
  %v145 = vadd.f32 0.0, %v144
  %146 = vdwg.mxu0
  %147 = vmatprep.subr.mxu0 0.0
  %148 = vmatpush1.msra.mxu0 0.0
  %149 = vmatprep.subr.mxu0 0.0
  %150 = vmatpush1.msra.mxu0 0.0
  %151 = vmatprep.subr.mxu0 0.0
  %152 = vmatpush1.msra.mxu0 0.0
  %153 = vmatprep.subr.mxu0 0.0
  %154 = vmatpush1.msra.mxu0 0.0
  %155 = vmatprep.subr.mxu0 0.0
  %156 = vmatpush1.msra.mxu0 0.0
  %157 = vmatprep.subr.mxu0 0.0
  %158 = vmatpush1.msra.mxu0 0.0
  %159 = vmatprep.subr.mxu0 0.0
  %160 = vmatpush1.msra.mxu0 0.0
  %161 = vmatprep.subr.mxu0 0.0
  %162 = vmatpush1.msra.mxu0 0.0
  %163 = vmatprep.subr.mxu0 0.0
  %164 = vmatpush1.msra.mxu0 0.0
  %165 = vmatprep.subr.mxu0 0.0
  %166 = vmatpush1.msra.mxu0 0.0
  %167 = vmatprep.subr.mxu0 0.0
  %168 = vmatpush1.msra.mxu0 0.0
  %169 = vmatprep.subr.mxu0 0.0
  %170 = vmatpush1.msra.mxu0 0.0
  %171 = vmatprep.subr.mxu0 0.0
  %172 = vmatpush1.msra.mxu0 0.0
  %173 = vmatprep.subr.mxu0 0.0
  %174 = vmatpush1.msra.mxu0 0.0
  %175 = vmatprep.subr.mxu0 0.0
  %176 = vmatpush1.msra.mxu0 0.0
  %177 = vmatprep.subr.mxu0 %v56
  %178 = vmatpush1.msra.mxu0 %v54
  %179 = vmatprep.subr.mxu0 0.0
  %180 = vmatpush2.msra.mxu0 0.0
  %181 = vmatprep.subr.mxu0 0.0
  %182 = vmatpush2.msra.mxu0 0.0
  %183 = vmatprep.subr.mxu0 0.0
  %184 = vmatpush2.msra.mxu0 0.0
  %185 = vmatprep.subr.mxu0 0.0
  %186 = vmatpush2.msra.mxu0 0.0
  %187 = vmatprep.subr.mxu0 0.0
  %188 = vmatpush2.msra.mxu0 0.0
  %189 = vmatprep.subr.mxu0 0.0
  %190 = vmatpush2.msra.mxu0 0.0
  %191 = vmatprep.subr.mxu0 0.0
  %192 = vmatpush2.msra.mxu0 0.0
  %193 = vmatprep.subr.mxu0 0.0
  %194 = vmatpush2.msra.mxu0 0.0
  %195 = vmatprep.subr.mxu0 0.0
  %196 = vmatpush2.msra.mxu0 0.0
  %197 = vmatprep.subr.mxu0 0.0
  %198 = vmatpush2.msra.mxu0 0.0
  %199 = vmatprep.subr.mxu0 0.0
  %200 = vmatpush2.msra.mxu0 0.0
  %201 = vmatprep.subr.mxu0 0.0
  %202 = vmatpush2.msra.mxu0 0.0
  %203 = vmatprep.subr.mxu0 0.0
  %204 = vmatpush2.msra.mxu0 0.0
  %205 = vmatprep.subr.mxu0 0.0
  %206 = vmatpush2.msra.mxu0 0.0
  %207 = vmatprep.subr.mxu0 0.0
  %208 = vmatpush2.msra.mxu0 0.0
  %209 = vmatprep.subr.mxu0 0.0
  %210 = vmatpush2.msra.mxu0 0.0
  %211 = vmatprep.mubr.f32.mxu0 0.0
  %212 = vmatmul.mubr.f32.gmra.mxu0 %v38
  %v213 = vpop.f32.mrf.mxu0
  %v214 = vadd.f32 0.0, %v213
  %v215 = vpop.f32.mrf.mxu0
  %v216 = vadd.f32 0.0, %v215
  %217 = vmatprep.mubr.f32.mxu0 0.0
  %218 = vmatmul.mubr.f32.gmra.mxu0 %v41
  %v219 = vpop.f32.mrf.mxu0
  %v220 = vadd.f32 0.0, %v219
  %v221 = vpop.f32.mrf.mxu0
  %v222 = vadd.f32 0.0, %v221
  %223 = vmatprep.mubr.f32.mxu0 0.0
  %224 = vmatmul.mubr.f32.gmra.mxu0 %v44
  %v225 = vpop.f32.mrf.mxu0
  %v226 = vadd.f32 0.0, %v225
  %v227 = vpop.f32.mrf.mxu0
  %v228 = vadd.f32 0.0, %v227
  %229 = vmatprep.mubr.f32.mxu0 0.0
  %230 = vmatmul.mubr.f32.gmra.mxu0 %v47
  %v231 = vpop.f32.mrf.mxu0
  %v232 = vadd.f32 0.0, %v231
  %v233 = vpop.f32.mrf.mxu0
  %v234 = vadd.f32 0.0, %v233
  %235 = vdwg.mxu0
  %v236 = vld [vmem:[%s2] sm:$0xff]
  %v237 = vld [vmem:[%s2 + $0x8] sm:$0xff]
  %v238 = vld [vmem:[%s2 + $0x10] sm:$0xff]
  %v239 = vld [vmem:[%s2 + $0x18] sm:$0xff]
  %v240 = vadd.f32 %v125, %v127
  %v241 = vadd.f32 %v240, %v214
  %v242 = vadd.f32 %v241, %v216
  %243 = vadd.xlane.f32.xlu0 %v242
  %v244 = vpop.xlane.xlu0 %243
  %v245 = vadd.f32 %v131, %v133
  %v246 = vadd.f32 %v245, %v220
  %v247 = vadd.f32 %v246, %v222
  %248 = vadd.xlane.f32.xlu0 %v247
  %v249 = vpop.xlane.xlu0 %248
  %v250 = vadd.f32 %v137, %v139
  %v251 = vadd.f32 %v250, %v226
  %v252 = vadd.f32 %v251, %v228
  %253 = vadd.xlane.f32.xlu0 %v252
  %v254 = vpop.xlane.xlu0 %253
  %v255 = vadd.f32 %v143, %v145
  %v256 = vadd.f32 %v255, %v232
  %v257 = vadd.f32 %v256, %v234
  %258 = vadd.xlane.f32.xlu0 %v257
  %v259 = vpop.xlane.xlu0 %258
  %v260 = vadd.f32 %v236, %v244
  %v261 = vadd.f32 %v237, %v249
  %v262 = vadd.f32 %v238, %v254
  %v263 = vadd.f32 %v239, %v259
  %vm264 = vcmask 7168
  %265 = vst.msk [vmem:[%s2] sm:$0xff] %vm264, %v260
  %266 = vst.msk [vmem:[%s2 + $0x8] sm:$0xff] %vm264, %v261
  %267 = vst.msk [vmem:[%s2 + $0x10] sm:$0xff] %vm264, %v262
  %268 = vst.msk [vmem:[%s2 + $0x18] sm:$0xff] %vm264, %v263
  %v269 = vld [vmem:[%s3] sm:$0xff]
  %v270 = vld [vmem:[%s3 + $0x8] sm:$0xff]
  %v271 = vld [vmem:[%s3 + $0x10] sm:$0xff]
  %v272 = vld [vmem:[%s3 + $0x18] sm:$0xff]
  %v273 = vmul.f32 %v125, %v125
  %v274 = vmul.f32 %v127, %v127
  %v275 = vmul.f32 %v214, %v214
  %v276 = vmul.f32 %v216, %v216
  %v277 = vmul.f32 %v131, %v131
  %v278 = vmul.f32 %v133, %v133
  %v279 = vmul.f32 %v220, %v220
  %v280 = vmul.f32 %v222, %v222
  %v281 = vmul.f32 %v137, %v137
  %v282 = vmul.f32 %v139, %v139
  %v283 = vmul.f32 %v226, %v226
  %v284 = vmul.f32 %v228, %v228
  %v285 = vmul.f32 %v143, %v143
  %v286 = vmul.f32 %v145, %v145
  %v287 = vmul.f32 %v232, %v232
  %v288 = vmul.f32 %v234, %v234
  %v289 = vadd.f32 %v273, %v274
  %v290 = vadd.f32 %v289, %v275
  %v291 = vadd.f32 %v290, %v276
  %292 = vadd.xlane.f32.xlu0 %v291
  %v293 = vpop.xlane.xlu0 %292
  %v294 = vadd.f32 %v277, %v278
  %v295 = vadd.f32 %v294, %v279
  %v296 = vadd.f32 %v295, %v280
  %297 = vadd.xlane.f32.xlu0 %v296
  %v298 = vpop.xlane.xlu0 %297
  %v299 = vadd.f32 %v281, %v282
  %v300 = vadd.f32 %v299, %v283
  %v301 = vadd.f32 %v300, %v284
  %302 = vadd.xlane.f32.xlu0 %v301
  %v303 = vpop.xlane.xlu0 %302
  %v304 = vadd.f32 %v285, %v286
  %v305 = vadd.f32 %v304, %v287
  %v306 = vadd.f32 %v305, %v288
  %307 = vadd.xlane.f32.xlu0 %v306
  %v308 = vpop.xlane.xlu0 %307
  %v309 = vadd.f32 %v269, %v293
  %v310 = vadd.f32 %v270, %v298
  %v311 = vadd.f32 %v271, %v303
  %v312 = vadd.f32 %v272, %v308
  %313 = vst.msk [vmem:[%s3] sm:$0xff] %vm264, %v309
  %314 = vst.msk [vmem:[%s3 + $0x8] sm:$0xff] %vm264, %v310
  %315 = vst.msk [vmem:[%s3 + $0x10] sm:$0xff] %vm264, %v311
  %316 = vst.msk [vmem:[%s3 + $0x18] sm:$0xff] %vm264, %v312
  // Predicated region
  $region14: #{tpu_custom_call.1} parent=0 // pred_check
    _
  $region15: #{tpu_custom_call.1} parent=0 // pred_check_branch
    %318 = sbr.rel (0) target = $region17
  $region16: #{tpu_custom_call.1} parent=0 // pred_region
    _
  $region17: #{tpu_custom_call.1} parent=0 // pred_fallthru
    _
  // Predicated region
  $region18: #{tpu_custom_call.1} parent=0 // pred_check
    _
  $region19: #{tpu_custom_call.1} parent=0 // pred_check_branch
    %320 = sbr.rel (0) target = $region21
  $region20: #{tpu_custom_call.1} parent=0 // pred_region
    _
  $region21: #{tpu_custom_call.1} parent=0 // pred_fallthru
    _
  // Predicated region
  $region22: #{tpu_custom_call.1} parent=0 // pred_check
    _
  $region23: #{tpu_custom_call.1} parent=0 // pred_check_branch
    %322 = sbr.rel (0) target = $region25
  $region24: #{tpu_custom_call.1} parent=0 // pred_region
    _
  $region25: #{tpu_custom_call.1} parent=0 // pred_fallthru
    _
  // Predicated region
  $region26: #{tpu_custom_call.1} parent=0 // pred_check
    _
  $region27: #{tpu_custom_call.1} parent=0 // pred_check_branch
    %324 = sbr.rel (0) target = $region29
  $region28: #{tpu_custom_call.1} parent=0 // pred_region
    _
  $region29: #{tpu_custom_call.1} parent=0 // pred_fallthru
    _

</llo_original>
